<compile_context>
chip_gen: v7x
topology: tpu7x:2x2x1
jax: 0.10.0
libtpu: 0.0.40
codegen_flags: <defaults>
</compile_context>

<pallas_src>
import functools

import jax
import jax.numpy as jnp
from jax import lax
from jax.experimental import pallas as pl
from jax.experimental.pallas import tpu as pltpu

MARGIN = 2.0

_LANE = 128
_SUBLANE_F32 = 8
_MAX_TILE_ROWS = 4096  # 4096 * 128 * 4B = 2 MiB per f32 input block


def _round_up(x, m):
    return (x + m - 1) // m * m


def _sublane_rows(dtype):
    """Packed sublane granularity for a dtype (8 f32 / 16 bf16 / 32 int8,bool)."""
    return {4: 8, 2: 16, 1: 32}.get(jnp.dtype(dtype).itemsize, 8)


def _tensorcores_per_device():
    """2 TensorCores per JAX device on megacore chips (v4/v5p/v7x); else 1."""
    try:
        kind = jax.devices()[0].device_kind.lower().replace(" ", "")
    except Exception:
        return 1
    if "lite" in kind or "v5e" in kind or "v6" in kind:
        return 1
    if "v4" in kind or "v5p" in kind or "v7" in kind or "tpu7" in kind:
        return 2
    return 1


def _contrastive_kernel(d_ref, l_ref, o_ref, *, margin, steps, rows, exact):
    c = pl.program_id(0)          # core-slice axis ("parallel")
    i = pl.program_id(1)          # reduction axis ("arbitrary")
    tile_rows = d_ref.shape[0]

    # Zero this core-slice's resident (8,128) partial-sum block on its first step.
    @pl.when(i == 0)
    def _():
        o_ref[...] = jnp.zeros_like(o_ref)

    d = d_ref[...].astype(jnp.float32)
    lab = l_ref[...].astype(jnp.float32)

    pos = jnp.maximum(jnp.abs(d) - 1.0, 0.0)       # clamp(|d| - 1,     min=0)
    neg = jnp.maximum(margin - d, 0.0)             # clamp(margin - d,  min=0)
    per_elem = lab * (pos * pos) + (1.0 - lab) * (neg * neg)

    def fold(x):
        # (tile_rows, 128) -> (8, 128): pure elementwise vreg adds (VALU only,
        # no per-step cross-lane reduce).
        return jnp.sum(x.reshape(-1, _SUBLANE_F32, _LANE), axis=0)

    if exact:
        # Grid tiles the array exactly: no masking code generated at all.
        o_ref[...] += fold(per_elem)
    else:
        # Only the final block of a core-slice can be ragged; rows / tile_rows
        # / steps are static, so the mask branch is taken at most once.
        slot = c * steps + i
        valid = rows - slot * tile_rows   # >= 1 by construction

        @pl.when(valid >= tile_rows)
        def _():
            o_ref[...] += fold(per_elem)

        @pl.when(valid < tile_rows)
        def _():
            ridx = lax.broadcasted_iota(jnp.int32, per_elem.shape, 0)
            o_ref[...] += fold(jnp.where(ridx < valid, per_elem, 0.0))


def contrastive_loss(euclidean_distance, label, *, margin=MARGIN):
    assert euclidean_distance.shape == label.shape
    total = euclidean_distance.size

    # Flatten to a lane-dense stream (free reshape for contiguous arrays).
    d_flat = euclidean_distance.reshape(-1)
    l_flat = label.reshape(-1)

    rows = pl.cdiv(total, _LANE)
    lane_pad = rows * _LANE - total
    if lane_pad:
        # < 128 elements; pad values (d = margin, label = 0) contribute exactly
        # 0 to the sum. Only hit when total is not a multiple of 128.
        d_flat = jnp.pad(d_flat, (0, lane_pad),
                         constant_values=jnp.asarray(margin, dtype=d_flat.dtype))
        l_flat = jnp.pad(l_flat, (0, lane_pad))
    d2 = d_flat.reshape(rows, _LANE)
    l2 = l_flat.reshape(rows, _LANE)

    # Dtype-aware sublane rounding (both streams must satisfy their packing).
    sub = max(_sublane_rows(d2.dtype), _sublane_rows(l2.dtype))

    # Problem-sized tiling; 2-way core split only where it can actually pay off.
    g = _tensorcores_per_device()
    steps = pl.cdiv(rows, g * _MAX_TILE_ROWS)
    tile_rows = _round_up(pl.cdiv(rows, g * steps), sub)
    if g > 1 and (g * steps - 1) * tile_rows >= rows:
        # Too few rows for every core-slice: fall back so no grid block starts
        # past the end of the array (keeps all block DMAs in bounds).
        g = 1
        steps = pl.cdiv(rows, _MAX_TILE_ROWS)
        tile_rows = _round_up(pl.cdiv(rows, steps), sub)

    exact = (g * steps * tile_rows == rows)

    kernel = functools.partial(_contrastive_kernel, margin=float(margin),
                               steps=steps, rows=rows, exact=exact)

    partials = pl.pallas_call(
        kernel,
        out_shape=jax.ShapeDtypeStruct((g * _SUBLANE_F32, _LANE), jnp.float32),
        grid_spec=pltpu.PrefetchScalarGridSpec(
            num_scalar_prefetch=0,
            grid=(g, steps),
            in_specs=[
                pl.BlockSpec((tile_rows, _LANE), lambda c, i: (c * steps + i, 0)),
                pl.BlockSpec((tile_rows, _LANE), lambda c, i: (c * steps + i, 0)),
            ],
            # One (8,128) partial-sum block per core-slice, resident across the
            # (last, "arbitrary") reduction axis. No shared block -> no race.
            out_specs=pl.BlockSpec((_SUBLANE_F32, _LANE), lambda c, i: (c, 0)),
        ),
        compiler_params=pltpu.CompilerParams(
            dimension_semantics=("parallel", "arbitrary"),
            vmem_limit_bytes=32 * 1024 * 1024,
        ),
    )(d2, l2)

    # Single cheap final reduce + mean in the wrapper.
    return jnp.sum(partials) / float(total)


def contrastive_loss_ref(d, lab, margin=MARGIN):
    d = d.astype(jnp.float32)
    lab = lab.astype(jnp.float32)
    pos = jnp.maximum(jnp.abs(d) - 1.0, 0.0)
    neg = jnp.maximum(margin - d, 0.0)
    return jnp.mean(lab * pos**2 + (1.0 - lab) * neg**2)


if __name__ == "__main__":
    key = jax.random.PRNGKey(0)
    k1, k2, k3, k4, k5, k6 = jax.random.split(key, 6)

    # (8,128)-aligned f32 case: zero padding, zero masking path.
    B, N = 16, 128
    d = jax.random.uniform(k1, (B, N), jnp.float32, 0.0, 3.0)
    lab = jax.random.bernoulli(k2, 0.5, (B, N)).astype(jnp.float32)
    out = jax.block_until_ready(contrastive_loss(d, lab))
    ref = contrastive_loss_ref(d, lab)
    assert jnp.allclose(out, ref, rtol=1e-5, atol=1e-5), (out, ref)

    # Unaligned f32 case: exercises the tiny lane pad + in-kernel row mask.
    d_odd = jax.random.uniform(k3, (7, 50), jnp.float32, 0.0, 3.0)
    l_odd = jax.random.bernoulli(k4, 0.5, (7, 50)).astype(jnp.float32)
    out2 = jax.block_until_ready(contrastive_loss(d_odd, l_odd))
    ref2 = contrastive_loss_ref(d_odd, l_odd)
    assert jnp.allclose(out2, ref2, rtol=1e-5, atol=1e-5), (out2, ref2)

    # Narrow-dtype (bf16) streaming case: dtype-aware sublane rounding (16),
    # no wrapper-side upcast (kernel upcasts per tile, accumulates in f32).
    d_bf = jax.random.uniform(k5, (25, 160), jnp.float32, 0.0, 3.0).astype(jnp.bfloat16)
    l_bf = jax.random.bernoulli(k6, 0.5, (25, 160)).astype(jnp.bfloat16)
    out3 = jax.block_until_ready(contrastive_loss(d_bf, l_bf))
    ref3 = contrastive_loss_ref(d_bf, l_bf)
    assert jnp.allclose(out3, ref3, rtol=1e-4, atol=1e-4), (out3, ref3)

    print("KERNEL_OK")
</pallas_src>

<mosaic_0001>
module attributes {stable_mosaic.version = 11 : i64} {
  func.func @_contrastive_kernel(%arg0: i32, %arg1: i32, %arg2: memref<16x128xf32, #tpu.memory_space<vmem>>, %arg3: memref<16x128xf32, #tpu.memory_space<vmem>>, %arg4: memref<8x128xf32, #tpu.memory_space<vmem>>) attributes {dimension_semantics = [#tpu.dimension_semantics<parallel>, #tpu.dimension_semantics<arbitrary>], iteration_bounds = array<i64: 1, 1>, scalar_prefetch = 0 : i64, scratch_operands = 0 : i64, tpu.core_type = #tpu.core_type<tc>, window_params = [{transform_indices = @transform_0, window_bounds = array<i64: 16, 128>}, {transform_indices = @transform_1, window_bounds = array<i64: 16, 128>}, {transform_indices = @transform_2, window_bounds = array<i64: 8, 128>}]} {
    %c0_i32 = arith.constant 0 : i32
    %0 = arith.cmpi eq, %arg1, %c0_i32 : i32
    %1 = arith.extui %0 : i1 to i32
    %c0_i32_0 = arith.constant 0 : i32
    %2 = arith.cmpi ne, %1, %c0_i32_0 : i32
    scf.if %2 {
      %cst_13 = arith.constant 0.000000e+00 : f32
      %26 = vector.broadcast %cst_13 : f32 to vector<8x128xf32>
      %c0_14 = arith.constant 0 : index
      %c0_15 = arith.constant 0 : index
      %27 = vector.load %arg4[%c0_14, %c0_15] : memref<8x128xf32, #tpu.memory_space<vmem>>, vector<8x128xf32>
      tpu.vector_store %arg4[%c0_14, %c0_15], %26 {strides = array<i32>} : memref<8x128xf32, #tpu.memory_space<vmem>>, vector<8x128xf32>,
    } else {
    }
    %c0 = arith.constant 0 : index
    %c0_1 = arith.constant 0 : index
    %3 = vector.load %arg2[%c0, %c0_1] : memref<16x128xf32, #tpu.memory_space<vmem>>, vector<16x128xf32>
    %c0_2 = arith.constant 0 : index
    %c0_3 = arith.constant 0 : index
    %4 = vector.load %arg3[%c0_2, %c0_3] : memref<16x128xf32, #tpu.memory_space<vmem>>, vector<16x128xf32>
    %5 = math.absf %3 : vector<16x128xf32>
    %cst = arith.constant 1.000000e+00 : f32
    %6 = vector.broadcast %cst : f32 to vector<16x128xf32>
    %7 = arith.subf %5, %6 : vector<16x128xf32>
    %cst_4 = arith.constant 0.000000e+00 : f32
    %8 = vector.broadcast %cst_4 : f32 to vector<16x128xf32>
    %9 = arith.maximumf %7, %8 : vector<16x128xf32>
    %cst_5 = arith.constant 2.000000e+00 : f32
    %10 = vector.broadcast %cst_5 : f32 to vector<16x128xf32>
    %11 = arith.subf %10, %3 : vector<16x128xf32>
    %cst_6 = arith.constant 0.000000e+00 : f32
    %12 = vector.broadcast %cst_6 : f32 to vector<16x128xf32>
    %13 = arith.maximumf %11, %12 : vector<16x128xf32>
    %14 = arith.mulf %9, %9 : vector<16x128xf32>
    %15 = arith.mulf %4, %14 : vector<16x128xf32>
    %cst_7 = arith.constant 1.000000e+00 : f32
    %16 = vector.broadcast %cst_7 : f32 to vector<16x128xf32>
    %17 = arith.subf %16, %4 : vector<16x128xf32>
    %18 = arith.mulf %13, %13 : vector<16x128xf32>
    %19 = arith.mulf %17, %18 : vector<16x128xf32>
    %20 = arith.addf %15, %19 : vector<16x128xf32>
    %c0_8 = arith.constant 0 : index
    %c0_9 = arith.constant 0 : index
    %21 = vector.load %arg4[%c0_8, %c0_9] : memref<8x128xf32, #tpu.memory_space<vmem>>, vector<8x128xf32>
    %22 = vector.shape_cast %20 : vector<16x128xf32> to vector<2x8x128xf32>
    %cst_10 = arith.constant dense<0.000000e+00> : vector<8x128xf32>
    %23 = vector.multi_reduction <add>, %22, %cst_10 [0] : vector<2x8x128xf32> to vector<8x128xf32>
    %24 = arith.addf %21, %23 : vector<8x128xf32>
    %c0_11 = arith.constant 0 : index
    %c0_12 = arith.constant 0 : index
    %25 = vector.load %arg4[%c0_11, %c0_12] : memref<8x128xf32, #tpu.memory_space<vmem>>, vector<8x128xf32>
    tpu.vector_store %arg4[%c0_11, %c0_12], %24 {strides = array<i32>} : memref<8x128xf32, #tpu.memory_space<vmem>>, vector<8x128xf32>,
    return
  }
  func.func @transform_0(%arg0: i32, %arg1: i32) -> (i32, i32) {
    %c1_i32 = arith.constant 1 : i32
    %0 = arith.muli %arg0, %c1_i32 : i32
    %1 = arith.addi %0, %arg1 : i32
    %c0_i32 = arith.constant 0 : i32
    %c0_i32_0 = arith.constant 0 : i32
    return %1, %c0_i32 : i32, i32
  }
  func.func @transform_1(%arg0: i32, %arg1: i32) -> (i32, i32) {
    %c1_i32 = arith.constant 1 : i32
    %0 = arith.muli %arg0, %c1_i32 : i32
    %1 = arith.addi %0, %arg1 : i32
    %c0_i32 = arith.constant 0 : i32
    %c0_i32_0 = arith.constant 0 : i32
    return %1, %c0_i32 : i32, i32
  }
  func.func @transform_2(%arg0: i32, %arg1: i32) -> (i32, i32) {
    %c0_i32 = arith.constant 0 : i32
    %c0_i32_0 = arith.constant 0 : i32
    return %arg0, %c0_i32 : i32, i32
  }
}

</mosaic_0001>

<llo_original>
// kernel: tpu_custom_call.1
$region0: #{tpu_custom_call.1}
  #allocation0 [shape = 'u32[]', space=smem, size = 0x4, offset = 0x4, fixed_abs, tag = 'smem constant byte address 0x4 - core index']
  #allocation1 [shape = 'u32[144,128]{1,0:T(1,128)}', space=vmem, size = 0x12000, scoped, tag = 'internal scratch']
  %s0 = inlined_call_operand.hbm [shape: f32[16,128], index: 0, kind: input, shape index: {}]
  %s1 = inlined_call_operand.hbm [shape: f32[16,128], index: 1, kind: input, shape index: {}]
  %s2 = inlined_call_operand.hbm [shape: f32[8,128], index: 2, kind: output, shape index: {}]
  %s3 = sld [smem:[#allocation0]]
  $region30: #{tpu_custom_call.1} parent=0
    _
  %s5 = ssub.s32 1, %s3
  %s6 = scalar_select 0, %s5, %s3
  $region1: #{tpu_custom_call.1} parent=0
    #allocation2 [shape = 'u8[8192]{0}', space=vmem, size = 0x2000, scoped, tag = 'input window, operand 0, single buffered']
    #allocation3 [shape = 's32[1]{0}', space=sflag, size = 0x4, scoped, tag = 'scoped memory for tpu_custom_call.1']
    #allocation4 [shape = 's32[1]{0}', space=sflag, size = 0x4, scoped, tag = 'scoped memory for tpu_custom_call.1']
    #allocation5 [shape = 'u8[8192]{0}', space=vmem, size = 0x2000, scoped, tag = 'input window, operand 1, single buffered']
    #allocation6 [shape = 's32[1]{0}', space=sflag, size = 0x4, scoped, tag = 'scoped memory for tpu_custom_call.1']
    #allocation7 [shape = 'u8[4096]{0}', space=vmem, size = 0x1000, scoped, tag = 'output window, operand 0, single buffered']
    %7 = vsyncpa [#allocation3], 0
    %8 = vsyncpa [#allocation6], 0
    %9 = vsyncpa [#allocation4], 0
    // Predicated region
    $region2: #{tpu_custom_call.1} parent=1 // pred_check
      _
    $region3: #{tpu_custom_call.1} parent=1 // pred_check_branch
      %11 = sbr.rel (0) target = $region5
    $region4: #{tpu_custom_call.1} parent=1 // pred_region
      %s12 = sadd.s32 0, 0
      %s13 = smul.u32 2, %s12
      %s15 = ssub.s32 256, 256
      %16 = vsyncadd [#allocation3], %s15
      %s17 = smul.addr %s13, 128
      %s18 = scalar_lea.hbm %s0, %s17
      %s19 = sshll.u32 [#allocation2], 4
      %s20 = int_to_ptr.vmem [resolvable:$true] %s19
      %25 = dma.hbm_to_vmem [thread:$0]  %s18, 256, %s20, [#allocation3], 128, 128, 8
    $region5: #{tpu_custom_call.1} parent=1 // pred_fallthru
      _
    // Predicated region
    $region6: #{tpu_custom_call.1} parent=1 // pred_check
      _
    $region7: #{tpu_custom_call.1} parent=1 // pred_check_branch
      %27 = sbr.rel (0) target = $region9
    $region8: #{tpu_custom_call.1} parent=1 // pred_region
      %s28 = sadd.s32 0, 0
      %s29 = smul.u32 2, %s28
      %s31 = ssub.s32 256, 256
      %32 = vsyncadd [#allocation6], %s31
      %s33 = smul.addr %s29, 128
      %s34 = scalar_lea.hbm %s1, %s33
      %s35 = sshll.u32 [#allocation5], 4
      %s36 = int_to_ptr.vmem [resolvable:$true] %s35
      %41 = dma.hbm_to_vmem [thread:$0]  %s34, 256, %s36, [#allocation6], 128, 128, 8
    $region9: #{tpu_custom_call.1} parent=1 // pred_fallthru
      _
    // Predicated region
    $region10: #{tpu_custom_call.1} parent=1 // pred_check
      _
    $region11: #{tpu_custom_call.1} parent=1 // pred_check_branch
      %43 = sbr.rel (0) target = $region13
    $region12: #{tpu_custom_call.1} parent=1 // pred_region
      %44 = dma.done [#allocation3], 256
    $region13: #{tpu_custom_call.1} parent=1 // pred_fallthru
      _
    // Predicated region
    $region14: #{tpu_custom_call.1} parent=1 // pred_check
      _
    $region15: #{tpu_custom_call.1} parent=1 // pred_check_branch
      %46 = sbr.rel (0) target = $region17
    $region16: #{tpu_custom_call.1} parent=1 // pred_region
      %47 = dma.done [#allocation6], 256
    $region17: #{tpu_custom_call.1} parent=1 // pred_fallthru
      _
    %s48 = sadd.s32 0, 0
    %s49 = smul.u32 2, %s48
    %s50 = sadd.s32 0, 0
    %s51 = smul.u32 2, %s50
    %p52 = scmp.eq.s32.totalorder 0, 0
    // Predicated region
    $region18: #{tpu_custom_call.1} parent=1 // pred_check
      %p53 = pneg %p52
    $region19: #{tpu_custom_call.1} parent=1 // pred_check_branch
      %55 = sbr.rel (%p53) target = $region21
    $region20: #{tpu_custom_call.1} parent=1 // pred_region
      %56 = vst [vmem:[#allocation7] sm:$0xff] 0.0
    $region21: #{tpu_custom_call.1} parent=1 // pred_fallthru
      _
    %v57 = vld [vmem:[#allocation2] sm:$0xff]
    %v58 = vld [vmem:[#allocation2 + $0x8] sm:$0xff]
    %v59 = vld [vmem:[#allocation5] sm:$0xff]
    %v60 = vld [vmem:[#allocation5 + $0x8] sm:$0xff]
    %v61 = vand.u32 2147483647, %v57
    %v62 = vand.u32 2147483647, %v58
    %v63 = vsub.f32 %v61, 1.0
    %v64 = vsub.f32 %v62, 1.0
    %v65 = vmax.f32 %v63, 0.0
    %v66 = vmax.f32 %v64, 0.0
    %v67 = vsub.f32 2.0, %v57
    %v68 = vsub.f32 2.0, %v58
    %v69 = vmax.f32 %v67, 0.0
    %v70 = vmax.f32 %v68, 0.0
    %v71 = vmul.f32 %v65, %v65
    %v72 = vmul.f32 %v66, %v66
    %v73 = vmul.f32 %v59, %v71
    %v74 = vmul.f32 %v60, %v72
    %v75 = vsub.f32 1.0, %v59
    %v76 = vsub.f32 1.0, %v60
    %v77 = vmul.f32 %v69, %v69
    %v78 = vmul.f32 %v70, %v70
    %v79 = vmul.f32 %v75, %v77
    %v80 = vmul.f32 %v76, %v78
    %v81 = vadd.f32 %v73, %v79
    %v82 = vadd.f32 %v74, %v80
    %v83 = vld [vmem:[#allocation7] sm:$0xff]
    %v84 = vadd.f32 %v81, %v82
    %v85 = vadd.f32 %v83, %v84
    %86 = vst [vmem:[#allocation7] sm:$0xff] %v85
    // Predicated region
    $region22: #{tpu_custom_call.1} parent=1 // pred_check
      _
    $region23: #{tpu_custom_call.1} parent=1 // pred_check_branch
      %88 = sbr.rel (0) target = $region25
    $region24: #{tpu_custom_call.1} parent=1 // pred_region
      %s90 = ssub.s32 128, 128
      %91 = vsyncadd [#allocation4], %s90
      %s93 = sshll.u32 [#allocation7], 4
      %s94 = int_to_ptr.vmem [resolvable:$true] %s93
      %96 = dma.vmem_to_hbm [thread:$0]  %s94, 128, %s2, [#allocation4]
    $region25: #{tpu_custom_call.1} parent=1 // pred_fallthru
      _
    // Predicated region
    $region26: #{tpu_custom_call.1} parent=1 // pred_check
      _
    $region27: #{tpu_custom_call.1} parent=1 // pred_check_branch
      %98 = sbr.rel (0) target = $region29
    $region28: #{tpu_custom_call.1} parent=1 // pred_region
      %99 = dma.done [#allocation4], 128
    $region29: #{tpu_custom_call.1} parent=1 // pred_fallthru
      _
    %100 = vsyncpa [#allocation3], 1
    %101 = vsyncpa [#allocation6], 1
    %102 = vsyncpa [#allocation4], 1

</llo_original>
